<compile_context>
chip_gen: v5e
topology: v5e:2x2
jax: 0.10.0
libtpu: 0.0.40
codegen_flags: <defaults>
</compile_context>

<pallas_src>
import functools

import jax
import jax.numpy as jnp
from jax.experimental import pallas as pl
from jax.experimental.pallas import tpu as pltpu

_MIB = 1024 * 1024


def _round_up(x, m):
    return -(-int(x) // int(m)) * int(m)


def _vmem_capacity_bytes():
    """Physical per-core VMEM, with a conservative fallback (v7x = 64 MiB)."""
    try:
        info = pltpu.get_tpu_info()
        cap = getattr(info, "vmem_capacity_bytes", None)
        if cap:
            return int(cap)
    except Exception:
        pass
    return 64 * _MIB


def _distill_kl_kernel(ys_ref, yt_ref, o_ref, acc_ref, *, inv_T, scale):
    i = pl.program_id(1)          # inner ("arbitrary") batch-tile axis

    @pl.when(i == 0)
    def _init():
        acc_ref[...] = jnp.zeros_like(acc_ref)

    # Load tile, upcast to f32 for math; scale by 1/T (multiply, not divide).
    ys = ys_ref[...].astype(jnp.float32) * inv_T
    yt = yt_ref[...].astype(jnp.float32) * inv_T

    # Max-shift for numerical stability (per-row keepdims -> (tb, 1)).
    ys_sh = ys - jnp.max(ys, axis=1, keepdims=True)
    yt_sh = yt - jnp.max(yt, axis=1, keepdims=True)

    # Only two full-tile exps; log_ps / log_pt / p_t tiles never materialized.
    e_s = jnp.exp(ys_sh)
    e_t = jnp.exp(yt_sh)
    s_s = jnp.sum(e_s, axis=1, keepdims=True)           # (tb, 1)
    s_t = jnp.sum(e_t, axis=1, keepdims=True)           # (tb, 1)

    # Per-row KL:
    #   sum_c p_t*(log p_t - log p_s)
    #     = (1/S_t) * sum_c e_t*(yt_sh - ys_sh) - (log S_t - log S_s)
    #     = dot * rcp_t + log(S_s * rcp_t)
    dot = jnp.sum(e_t * (yt_sh - ys_sh), axis=1, keepdims=True)  # (tb, 1)
    rcp_t = pl.reciprocal(s_t)                 # exact; EUP slot, reused twice
    row_kl = dot * rcp_t + jnp.log(s_s * rcp_t)          # single log per row

    # Wide accumulator: no cross-sublane reduce inside the streaming loop.
    acc_ref[...] += row_kl                                # (tb, 1)

    @pl.when(i == pl.num_programs(1) - 1)
    def _finalize():
        o_ref[...] = jnp.sum(acc_ref[...], keepdims=True) * scale  # (1, 1)


def distill_kl(y_s, y_t, T, *, tb=None, downcast_inputs=None):
    """Pallas implementation of DistillKL.forward(y_s, y_t). Returns scalar f32.

    tb: optional batch-tile override (rows). Default: largest tile fitting the
        generation-aware VMEM budget.
    downcast_inputs: optional dtype (e.g. jnp.bfloat16) to cast logits to at the
        wrapper boundary (halves HBM traffic on bandwidth-bound chips); math in
        the kernel is always f32.
    """
    assert y_s.shape == y_t.shape and y_s.ndim == 2
    B, C = y_s.shape

    if downcast_inputs is not None:
        y_s = y_s.astype(downcast_inputs)
        y_t = y_t.astype(downcast_inputs)
    y_t = y_t.astype(y_s.dtype)

    itemsize = jnp.dtype(y_s.dtype).itemsize
    sublane = 8 * max(1, 4 // itemsize)      # 8 f32, 16 bf16, 32 int8/fp8

    # Generation-aware VMEM budget for the pipelined buffers + f32 working set.
    # v5e/v6e (128 MiB physical): 48 MiB budget, 64 MiB scoped limit.
    # v7x     ( 64 MiB physical): 32 MiB budget, 48 MiB scoped limit.
    vmem_cap = _vmem_capacity_bytes()
    budget = max(12 * _MIB, min(48 * _MIB, vmem_cap // 2))
    vmem_limit = int(min(vmem_cap, budget + 16 * _MIB))

    # Bytes per batch row inside the budget:
    #   2 inputs x 2 double-buffers  -> 4 * C * itemsize
    #   ~6 live f32 (tb, C) intermediates -> 24 * C   (conservative)
    #   (tb, 1) f32 accumulator (lane-padded to 128)  -> 512
    bytes_per_row = 4 * C * itemsize + 24 * C + 512
    tb_fit = max(sublane, (budget // bytes_per_row) // sublane * sublane)
    if tb is None:
        tb = int(tb_fit)
    else:
        tb = max(sublane, (int(tb) // sublane) * sublane)

    # Leading partial-sum axis: sharded across TensorCores on v7x ("parallel"),
    # essentially free on single-core chips.
    npart = 2 if B >= 2 * sublane else 1
    per = -(-B // npart)                       # rows each partial must cover
    tb = min(tb, _round_up(per, sublane))      # never bigger than the work
    if npart == 1 and tb >= B:
        tb = B                                 # single full block, no padding
        steps = 1
    else:
        steps = -(-per // tb)
    Bp = npart * steps * tb
    if Bp != B:
        pad = Bp - B
        # Zero-padded rows give uniform-vs-uniform softmax => KL == 0 exactly,
        # so no in-kernel row mask is needed.
        y_s = jnp.pad(y_s, ((0, pad), (0, 0)))
        y_t = jnp.pad(y_t, ((0, pad), (0, 0)))

    kernel = functools.partial(
        _distill_kl_kernel,
        inv_T=float(1.0 / T),
        scale=float(T) * float(T) / float(B),   # un-padded B
    )

    cost = pl.CostEstimate(
        flops=int(10 * Bp * C),
        transcendentals=int(2 * Bp * C + 2 * Bp),
        bytes_accessed=int(2 * Bp * C * itemsize + npart * 4),
    )

    partials = pl.pallas_call(
        kernel,
        out_shape=jax.ShapeDtypeStruct((npart, 1), jnp.float32),
        grid_spec=pltpu.PrefetchScalarGridSpec(
            num_scalar_prefetch=0,
            grid=(npart, steps),
            in_specs=[
                pl.BlockSpec((tb, C), lambda c, i: (c * steps + i, 0)),
                pl.BlockSpec((tb, C), lambda c, i: (c * steps + i, 0)),
            ],
            out_specs=pl.BlockSpec((1, 1), lambda c, i: (c, 0)),
            scratch_shapes=[pltpu.VMEM((tb, 1), jnp.float32)],
        ),
        compiler_params=pltpu.CompilerParams(
            dimension_semantics=("parallel", "arbitrary"),
            vmem_limit_bytes=vmem_limit,
        ),
        cost_estimate=cost,
    )(y_s, y_t)
    return jnp.sum(partials)


def _distill_kl_ref(y_s, y_t, T):
    # Pure-JAX reference mirroring the PyTorch module.
    log_ps = jax.nn.log_softmax(y_s / T, axis=1)
    p_t = jax.nn.softmax(y_t / T, axis=1)
    log_pt = jax.nn.log_softmax(y_t / T, axis=1)
    kl = jnp.sum(p_t * (log_pt - log_ps))
    return kl * (T ** 2) / y_s.shape[0]


if __name__ == "__main__":
    T = 4.0
    key = jax.random.PRNGKey(0)

    # Test 1: small lane-dense case (C = 128), single block, single partial.
    B, C = 8, 128
    ks, kt = jax.random.split(key)
    y_s = jax.random.normal(ks, (B, C), dtype=jnp.float32)
    y_t = jax.random.normal(kt, (B, C), dtype=jnp.float32)
    loss = jax.block_until_ready(distill_kl(y_s, y_t, T))
    ref = _distill_kl_ref(y_s, y_t, T)
    assert jnp.allclose(loss, ref, rtol=1e-4, atol=1e-5), (loss, ref)

    # Test 2: multi-tile grid, 2 partial sums, batch padding (B=20, tb=8).
    B2, C2 = 20, 256
    k1, k2 = jax.random.split(kt)
    y_s2 = jax.random.normal(k1, (B2, C2), dtype=jnp.float32)
    y_t2 = jax.random.normal(k2, (B2, C2), dtype=jnp.float32)
    loss2 = jax.block_until_ready(distill_kl(y_s2, y_t2, T, tb=8))
    ref2 = _distill_kl_ref(y_s2, y_t2, T)
    assert jnp.allclose(loss2, ref2, rtol=1e-4, atol=1e-5), (loss2, ref2)

    # Test 3: bf16 logits (halves HBM traffic; accumulation stays f32).
    y_s3 = y_s.astype(jnp.bfloat16)
    y_t3 = y_t.astype(jnp.bfloat16)
    loss3 = jax.block_until_ready(distill_kl(y_s3, y_t3, T))
    ref3 = _distill_kl_ref(y_s3.astype(jnp.float32), y_t3.astype(jnp.float32), T)
    assert jnp.allclose(loss3, ref3, rtol=1e-4, atol=1e-4), (loss3, ref3)

    print("KERNEL_OK")
</pallas_src>

<mosaic_0001>
module attributes {stable_mosaic.version = 11 : i64} {
  func.func @_distill_kl_kernel(%arg0: i32, %arg1: i32, %arg2: memref<8x128xf32, #tpu.memory_space<vmem>>, %arg3: memref<8x128xf32, #tpu.memory_space<vmem>>, %arg4: memref<1x1xf32, #tpu.memory_space<vmem>>, %arg5: memref<8x1xf32, #tpu.memory_space<vmem>>) attributes {dimension_semantics = [#tpu.dimension_semantics<parallel>, #tpu.dimension_semantics<arbitrary>], iteration_bounds = array<i64: 1, 1>, scalar_prefetch = 0 : i64, scratch_operands = 1 : i64, tpu.core_type = #tpu.core_type<tc>, window_params = [{transform_indices = @transform_0, window_bounds = array<i64: 8, 128>}, {transform_indices = @transform_1, window_bounds = array<i64: 8, 128>}, {transform_indices = @transform_2, window_bounds = array<i64: 1, 1>}]} {
    %c0_i32 = arith.constant 0 : i32
    %0 = arith.cmpi eq, %arg1, %c0_i32 : i32
    %1 = arith.extui %0 : i1 to i32
    %c0_i32_0 = arith.constant 0 : i32
    %2 = arith.cmpi ne, %1, %c0_i32_0 : i32
    scf.if %2 {
      %cst_16 = arith.constant 0.000000e+00 : f32
      %38 = vector.broadcast %cst_16 : f32 to vector<8x1xf32>
      %c0_17 = arith.constant 0 : index
      %c0_18 = arith.constant 0 : index
      %39 = vector.load %arg5[%c0_17, %c0_18] : memref<8x1xf32, #tpu.memory_space<vmem>>, vector<8x1xf32>
      tpu.vector_store %arg5[%c0_17, %c0_18], %38 {strides = array<i32>} : memref<8x1xf32, #tpu.memory_space<vmem>>, vector<8x1xf32>,
    } else {
    }
    %c0 = arith.constant 0 : index
    %c0_1 = arith.constant 0 : index
    %3 = vector.load %arg2[%c0, %c0_1] : memref<8x128xf32, #tpu.memory_space<vmem>>, vector<8x128xf32>
    %cst = arith.constant 2.500000e-01 : f32
    %4 = vector.broadcast %cst : f32 to vector<8x128xf32>
    %5 = arith.mulf %3, %4 : vector<8x128xf32>
    %c0_2 = arith.constant 0 : index
    %c0_3 = arith.constant 0 : index
    %6 = vector.load %arg3[%c0_2, %c0_3] : memref<8x128xf32, #tpu.memory_space<vmem>>, vector<8x128xf32>
    %cst_4 = arith.constant 2.500000e-01 : f32
    %7 = vector.broadcast %cst_4 : f32 to vector<8x128xf32>
    %8 = arith.mulf %6, %7 : vector<8x128xf32>
    %cst_5 = arith.constant dense<0xFF800000> : vector<8xf32>
    %9 = vector.multi_reduction <maximumf>, %5, %cst_5 [1] : vector<8x128xf32> to vector<8xf32>
    %10 = vector.shape_cast %9 : vector<8xf32> to vector<8x1xf32>
    %11 = vector.broadcast %10 : vector<8x1xf32> to vector<8x128xf32>
    %12 = arith.subf %5, %11 : vector<8x128xf32>
    %cst_6 = arith.constant dense<0xFF800000> : vector<8xf32>
    %13 = vector.multi_reduction <maximumf>, %8, %cst_6 [1] : vector<8x128xf32> to vector<8xf32>
    %14 = vector.shape_cast %13 : vector<8xf32> to vector<8x1xf32>
    %15 = vector.broadcast %14 : vector<8x1xf32> to vector<8x128xf32>
    %16 = arith.subf %8, %15 : vector<8x128xf32>
    %17 = math.exp %12 : vector<8x128xf32>
    %18 = math.exp %16 : vector<8x128xf32>
    %cst_7 = arith.constant dense<0.000000e+00> : vector<8xf32>
    %19 = vector.multi_reduction <add>, %17, %cst_7 [1] : vector<8x128xf32> to vector<8xf32>
    %20 = vector.shape_cast %19 : vector<8xf32> to vector<8x1xf32>
    %cst_8 = arith.constant dense<0.000000e+00> : vector<8xf32>
    %21 = vector.multi_reduction <add>, %18, %cst_8 [1] : vector<8x128xf32> to vector<8xf32>
    %22 = vector.shape_cast %21 : vector<8xf32> to vector<8x1xf32>
    %23 = arith.subf %16, %12 : vector<8x128xf32>
    %24 = arith.mulf %18, %23 : vector<8x128xf32>
    %cst_9 = arith.constant dense<0.000000e+00> : vector<8xf32>
    %25 = vector.multi_reduction <add>, %24, %cst_9 [1] : vector<8x128xf32> to vector<8xf32>
    %26 = vector.shape_cast %25 : vector<8xf32> to vector<8x1xf32>
    %27 = tpu.reciprocal %22 : vector<8x1xf32> -> vector<8x1xf32>
    %28 = arith.mulf %26, %27 : vector<8x1xf32>
    %29 = arith.mulf %20, %27 : vector<8x1xf32>
    %30 = math.log %29 : vector<8x1xf32>
    %31 = arith.addf %28, %30 : vector<8x1xf32>
    %c0_10 = arith.constant 0 : index
    %c0_11 = arith.constant 0 : index
    %32 = vector.load %arg5[%c0_10, %c0_11] : memref<8x1xf32, #tpu.memory_space<vmem>>, vector<8x1xf32>
    %33 = arith.addf %32, %31 : vector<8x1xf32>
    %c0_12 = arith.constant 0 : index
    %c0_13 = arith.constant 0 : index
    %34 = vector.load %arg5[%c0_12, %c0_13] : memref<8x1xf32, #tpu.memory_space<vmem>>, vector<8x1xf32>
    tpu.vector_store %arg5[%c0_12, %c0_13], %33 {strides = array<i32>} : memref<8x1xf32, #tpu.memory_space<vmem>>, vector<8x1xf32>,
    %c0_i32_14 = arith.constant 0 : i32
    %35 = arith.cmpi eq, %arg1, %c0_i32_14 : i32
    %36 = arith.extui %35 : i1 to i32
    %c0_i32_15 = arith.constant 0 : i32
    %37 = arith.cmpi ne, %36, %c0_i32_15 : i32
    scf.if %37 {
      %c0_16 = arith.constant 0 : index
      %c0_17 = arith.constant 0 : index
      %38 = vector.load %arg5[%c0_16, %c0_17] : memref<8x1xf32, #tpu.memory_space<vmem>>, vector<8x1xf32>
      %39 = vector.shape_cast %38 : vector<8x1xf32> to vector<1x8x1xf32>
      %cst_18 = arith.constant dense<0.000000e+00> : vector<1xf32>
      %40 = vector.multi_reduction <add>, %39, %cst_18 [1, 2] : vector<1x8x1xf32> to vector<1xf32>
      %41 = vector.shape_cast %40 : vector<1xf32> to vector<1x1x1xf32>
      %42 = vector.extract %41[0, 0, 0] : f32 from vector<1x1x1xf32>
      %43 = vector.broadcast %42 : f32 to vector<1x1xf32>
      %cst_19 = arith.constant 2.000000e+00 : f32
      %44 = vector.broadcast %cst_19 : f32 to vector<1x1xf32>
      %45 = arith.mulf %43, %44 : vector<1x1xf32>
      %c0_20 = arith.constant 0 : index
      %c0_21 = arith.constant 0 : index
      %46 = vector.load %arg4[%c0_20, %c0_21] : memref<1x1xf32, #tpu.memory_space<vmem>>, vector<1x1xf32>
      tpu.vector_store %arg4[%c0_20, %c0_21], %45 {strides = array<i32>} : memref<1x1xf32, #tpu.memory_space<vmem>>, vector<1x1xf32>,
    } else {
    }
    return
  }
  func.func @transform_0(%arg0: i32, %arg1: i32) -> (i32, i32) {
    %c1_i32 = arith.constant 1 : i32
    %0 = arith.muli %arg0, %c1_i32 : i32
    %1 = arith.addi %0, %arg1 : i32
    %c0_i32 = arith.constant 0 : i32
    %c0_i32_0 = arith.constant 0 : i32
    return %1, %c0_i32 : i32, i32
  }
  func.func @transform_1(%arg0: i32, %arg1: i32) -> (i32, i32) {
    %c1_i32 = arith.constant 1 : i32
    %0 = arith.muli %arg0, %c1_i32 : i32
    %1 = arith.addi %0, %arg1 : i32
    %c0_i32 = arith.constant 0 : i32
    %c0_i32_0 = arith.constant 0 : i32
    return %1, %c0_i32 : i32, i32
  }
  func.func @transform_2(%arg0: i32, %arg1: i32) -> (i32, i32) {
    %c0_i32 = arith.constant 0 : i32
    %c0_i32_0 = arith.constant 0 : i32
    return %arg0, %c0_i32 : i32, i32
  }
}

</mosaic_0001>

<llo_original>
// kernel: tpu_custom_call.1
$region0: #{tpu_custom_call.1}
  #allocation0 [shape = 'u32[]', space=smem, size = 0x4, offset = 0x4, fixed_abs, tag = 'smem constant byte address 0x4 - core index']
  #allocation1 [shape = 'u32[72,128]{1,0:T(1,128)}', space=vmem, size = 0x9000, scoped, tag = 'internal scratch']
  #allocation2 [shape = 'f32[8,1]{1,0:T(8,128)}', space=vmem, size = 0x1000, scoped, tag = 'scratch operand']
  %s0 = inlined_call_operand.hbm [shape: f32[8,128], index: 0, kind: input, shape index: {}]
  %s1 = inlined_call_operand.hbm [shape: f32[8,128], index: 1, kind: input, shape index: {}]
  %s2 = inlined_call_operand.hbm [shape: f32[1,1], index: 2, kind: output, shape index: {}]
  %s3 = sld [smem:[#allocation0]]
  $region34: #{tpu_custom_call.1} parent=0
    _
  %s5 = ssub.s32 1, %s3
  %s6 = scalar_select 0, %s5, %s3
  $region1: #{tpu_custom_call.1} parent=0
    #allocation3 [shape = 'u8[4096]{0}', space=vmem, size = 0x1000, scoped, tag = 'input window, operand 0, single buffered']
    #allocation4 [shape = 's32[1]{0}', space=sflag, size = 0x4, scoped, tag = 'scoped memory for tpu_custom_call.1']
    #allocation5 [shape = 's32[1]{0}', space=sflag, size = 0x4, scoped, tag = 'scoped memory for tpu_custom_call.1']
    #allocation6 [shape = 'u8[4096]{0}', space=vmem, size = 0x1000, scoped, tag = 'input window, operand 1, single buffered']
    #allocation7 [shape = 's32[1]{0}', space=sflag, size = 0x4, scoped, tag = 'scoped memory for tpu_custom_call.1']
    #allocation8 [shape = 'u8[512]{0}', space=vmem, size = 0x400, scoped, tag = 'output window, operand 0, single buffered']
    %7 = vsyncpa [#allocation4], 0
    %8 = vsyncpa [#allocation7], 0
    %9 = vsyncpa [#allocation5], 0
    // Predicated region
    $region2: #{tpu_custom_call.1} parent=1 // pred_check
      _
    $region3: #{tpu_custom_call.1} parent=1 // pred_check_branch
      %11 = sbr.rel (0) target = $region5
    $region4: #{tpu_custom_call.1} parent=1 // pred_region
      %s12 = sadd.s32 0, 0
      %14 = vsyncadd [#allocation4], 0
      %s15 = smul.addr %s12, 8
      %s16 = scalar_lea.hbm %s0, %s15
      %s18 = sshll.u32 %s16, 4
      %s19 = int_to_ptr.hbm [resolvable:$true] %s18
      %s20 = sshll.u32 [#allocation3], 4
      %s21 = int_to_ptr.vmem [resolvable:$true] %s20
      %23 = dma.hbm_to_vmem [thread:$0]  %s19, 128, %s21, [#allocation4]
    $region5: #{tpu_custom_call.1} parent=1 // pred_fallthru
      _
    // Predicated region
    $region6: #{tpu_custom_call.1} parent=1 // pred_check
      _
    $region7: #{tpu_custom_call.1} parent=1 // pred_check_branch
      %25 = sbr.rel (0) target = $region9
    $region8: #{tpu_custom_call.1} parent=1 // pred_region
      %s26 = sadd.s32 0, 0
      %28 = vsyncadd [#allocation7], 0
      %s29 = smul.addr %s26, 8
      %s30 = scalar_lea.hbm %s1, %s29
      %s32 = sshll.u32 %s30, 4
      %s33 = int_to_ptr.hbm [resolvable:$true] %s32
      %s34 = sshll.u32 [#allocation6], 4
      %s35 = int_to_ptr.vmem [resolvable:$true] %s34
      %37 = dma.hbm_to_vmem [thread:$0]  %s33, 128, %s35, [#allocation7]
    $region9: #{tpu_custom_call.1} parent=1 // pred_fallthru
      _
    // Predicated region
    $region10: #{tpu_custom_call.1} parent=1 // pred_check
      _
    $region11: #{tpu_custom_call.1} parent=1 // pred_check_branch
      %39 = sbr.rel (0) target = $region13
    $region12: #{tpu_custom_call.1} parent=1 // pred_region
      %41 = dma.done [#allocation4], 128
    $region13: #{tpu_custom_call.1} parent=1 // pred_fallthru
      _
    // Predicated region
    $region14: #{tpu_custom_call.1} parent=1 // pred_check
      _
    $region15: #{tpu_custom_call.1} parent=1 // pred_check_branch
      %43 = sbr.rel (0) target = $region17
    $region16: #{tpu_custom_call.1} parent=1 // pred_region
      %45 = dma.done [#allocation7], 128
    $region17: #{tpu_custom_call.1} parent=1 // pred_fallthru
      _
    %s46 = sadd.s32 0, 0
    %s47 = sadd.s32 0, 0
    %p48 = scmp.eq.s32.totalorder 0, 0
    // Predicated region
    $region18: #{tpu_custom_call.1} parent=1 // pred_check
      %p49 = pneg %p48
    $region19: #{tpu_custom_call.1} parent=1 // pred_check_branch
      %51 = sbr.rel (%p49) target = $region21
    $region20: #{tpu_custom_call.1} parent=1 // pred_region
      %vm52 = vcmask 7168
      %53 = vst.msk [vmem:[#allocation2] sm:$0xff] %vm52, 0.0
    $region21: #{tpu_custom_call.1} parent=1 // pred_fallthru
      _
    %v54 = vld [vmem:[#allocation3] sm:$0xff]
    %v55 = vmul.f32 %v54, 0.25
    %v56 = vld [vmem:[#allocation6] sm:$0xff]
    %v57 = vmul.f32 %v56, 0.25
    %58 = vmax.xlane.f32.xlu0 %v55
    %v59 = vpop.xlane.xlu0 %58
    %v60 = vsub.f32 %v55, %v59
    %61 = vmax.xlane.f32.xlu0 %v57
    %v62 = vpop.xlane.xlu0 %61
    %v63 = vsub.f32 %v57, %v62
    %v64 = vmul.f32 %v60, 1.442695
    %v65 = vpow.pop %v64
    %v66 = vmul.f32 %v63, 1.442695
    %v67 = vpow.pop %v66
    %68 = vadd.xlane.f32.xlu0 %v65
    %v69 = vpop.xlane.xlu0 %68
    %70 = vadd.xlane.f32.xlu0 %v67
    %v71 = vpop.xlane.xlu0 %70
    %v72 = vsub.f32 %v63, %v60
    %v73 = vmul.f32 %v67, %v72
    %74 = vadd.xlane.f32.xlu0 %v73
    %v75 = vpop.xlane.xlu0 %74
    %v76 = vrcp.pop %v71
    %v77 = vmul.f32 %v71, %v76
    %v78 = vsub.f32 1.0, %v77
    %v79 = vmul.f32 %v76, %v78
    %v80 = vadd.f32 %v76, %v79
    %vm81 = vweird.f32 %v71
    %vm82 = vweird.f32 %v76
    %vm83 = vmor %vm81, %vm82
    %v84 = vsel %vm83, %v76, %v80
    %v85 = vand.u32 2147483647, %v71
    %vm86 = vcmp.eq.f32.partialorder %v85, 8.507059e+37
    %v87 = vand.u32 %v71, 2147483648
    %v88 = vor.u32 1.1754944e-38, %v87
    %v89 = vsel %vm86, %v88, %v84
    %v90 = vmul.f32 %v75, %v89
    %v91 = vmul.f32 %v69, %v89
    %v92 = vlog2.pop %v91
    %v93 = vmul.f32 %v92, 0.6931472
    %v94 = vadd.f32 %v90, %v93
    %v95 = vld [vmem:[#allocation2] sm:$0xff]
    %v96 = vadd.f32 %v95, %v94
    %vm97 = vcmask 7168
    %98 = vst.msk [vmem:[#allocation2] sm:$0xff] %vm97, %v96
    // Predicated region
    $region22: #{tpu_custom_call.1} parent=1 // pred_check
      %p99 = pneg %p48
    $region23: #{tpu_custom_call.1} parent=1 // pred_check_branch
      %101 = sbr.rel (%p99) target = $region25
    $region24: #{tpu_custom_call.1} parent=1 // pred_region
      %v102 = vld [vmem:[#allocation2] sm:$0xff]
      %v103 = vsel %vm97, %v102, 0.0
      %104 = vadd.xlane.f32.xlu0 %v103
      %v105 = vpop.xlane.xlu0 %104
      %v106 = vrot.slane %v105, 4
      %v107 = vadd.f32 %v105, %v106
      %v108 = vrot.slane %v107, 2
      %v109 = vadd.f32 %v107, %v108
      %v110 = vrot.slane %v109, 1
      %v111 = vadd.f32 %v109, %v110
      %s112 = vtos %v111
      %v113 = vstv %s112
      %v114 = vmul.f32 %v113, 2.0
      %vm115 = vcmask 0
      %116 = vst.msk [vmem:[#allocation8] sm:$0x1] %vm115, %v114
    $region25: #{tpu_custom_call.1} parent=1 // pred_fallthru
      _
    // Predicated region
    $region26: #{tpu_custom_call.1} parent=1 // pred_check
      _
    $region27: #{tpu_custom_call.1} parent=1 // pred_check_branch
      %118 = sbr.rel (0) target = $region29
    $region28: #{tpu_custom_call.1} parent=1 // pred_region
      %120 = vsyncadd [#allocation5], 0
      %s122 = sshll.u32 [#allocation8], 4
      %s123 = int_to_ptr.vmem [resolvable:$true] %s122
      %s124 = sshll.u32 %s2, 4
      %s125 = int_to_ptr.hbm [resolvable:$true] %s124
      %127 = dma.vmem_to_hbm [thread:$0]  %s123, 16, %s125, [#allocation5]
    $region29: #{tpu_custom_call.1} parent=1 // pred_fallthru
      _
    // Predicated region
    $region30: #{tpu_custom_call.1} parent=1 // pred_check
      _
    $region31: #{tpu_custom_call.1} parent=1 // pred_check_branch
      %129 = sbr.rel (0) target = $region33
    $region32: #{tpu_custom_call.1} parent=1 // pred_region
      %131 = dma.done [#allocation5], 16
    $region33: #{tpu_custom_call.1} parent=1 // pred_fallthru
      _
    %132 = vsyncpa [#allocation4], 1
    %133 = vsyncpa [#allocation7], 1
    %134 = vsyncpa [#allocation5], 1

</llo_original>
